<compile_context>
chip_gen: v7x
topology: tpu7x:2x2x1
jax: 0.10.0
libtpu: 0.0.40
codegen_flags: <defaults>
</compile_context>

<pallas_src>
import functools

import jax
import jax.numpy as jnp
from jax.experimental import pallas as pl
from jax.experimental.pallas import tpu as pltpu

_LANE = 128
_SUBLANE = 8
_NEG_INF = -1e30  # bias for padded logit columns so they vanish in the LSE


def _round_up(x, m):
    return (x + m - 1) // m * m


def _device_budget():
    """Return (num_tensorcores, scoped-VMEM budget bytes) for the local TPU generation."""
    try:
        kind = jax.devices()[0].device_kind.lower()
    except Exception:
        kind = ""
    if "v5 lite" in kind or "v5e" in kind or "v6" in kind:
        return 1, 96 * 1024 * 1024          # single TC, 128 MiB physical VMEM
    if "v4" in kind or "v5p" in kind or "v5" in kind:
        return 2, 96 * 1024 * 1024          # megacore, 128 MiB physical VMEM
    if "7" in kind:
        return 2, 48 * 1024 * 1024          # v7x: 2 TCs, only 64 MiB per TC
    return 1, 48 * 1024 * 1024              # conservative default


def _estimate_vmem_bytes(tb, K, Kh, Lp, cdt_size, x_size, logits_size,
                         return_logits, compute_loss):
    """Rough VMEM footprint of one grid step (weights single-buffered)."""
    Kl = _round_up(K, _LANE)                                    # lane-padded x width
    weights = (_round_up(K, 32) * Kh + Kh * Lp) * cdt_size + (Kh + Lp) * 4 * _SUBLANE
    x_blk = 2 * tb * Kl * x_size                                # double-buffered x tiles
    lbl_blk = (2 * tb * _LANE * 4) if compute_loss else 0       # lane-padded labels
    logit_blk = (2 * tb * Lp * logits_size) if return_logits else 0
    loss_blk = (2 * _SUBLANE * _LANE * 4) if compute_loss else 0
    interm = tb * (Kl * cdt_size + Kh * (4 + cdt_size) + 3 * Lp * 4)  # h, casts, exp temps
    return weights + x_blk + lbl_blk + logit_blk + loss_blk + interm


def _choose_tile_rows(B, K, Kh, Lp, cdt_size, x_size, logits_size,
                      return_logits, compute_loss, num_cores, budget, tile_rows):
    if tile_rows is None:
        if num_cores >= 2:
            # Split rows so the "parallel" grid axis has >= num_cores steps.
            tile_rows = min(512, _round_up(pl.cdiv(B, num_cores), _SUBLANE))
        else:
            # Single TC: fewer, larger steps amortize the ~0.35us/step overhead.
            tile_rows = 1024
    tb = max(_SUBLANE, min(_round_up(tile_rows, _SUBLANE), _round_up(B, _SUBLANE)))
    while tb > _SUBLANE and _estimate_vmem_bytes(
            tb, K, Kh, Lp, cdt_size, x_size, logits_size,
            return_logits, compute_loss) > budget:
        tb = max(_SUBLANE, _round_up(tb // 2, _SUBLANE))
    return tb


def _mlp_ce_kernel(*refs, compute_dtype, write_logits, compute_loss):
    """x:(tb,K) f32/bf16, w1:(K,Kh), b1:(1,Kh) f32, w2:(Kh,Lp), b2:(1,Lp) f32,
    [labels:(tb,1) int32, -1 marks padded rows].
    Outputs: [logits (tb,Lp) if write_logits], [loss partial (1,1,128) f32 if compute_loss]."""
    if compute_loss:
        x_ref, w1_ref, b1_ref, w2_ref, b2_ref, labels_ref = refs[:6]
        out_refs = refs[6:]
    else:
        x_ref, w1_ref, b1_ref, w2_ref, b2_ref = refs[:5]
        labels_ref = None
        out_refs = refs[5:]

    # In-kernel cast of the f32 HBM stream (VPU work, hidden under the MXU).
    x = x_ref[...].astype(compute_dtype)

    # Hidden layer + ReLU (MXU matmul, f32 accumulate; bias + activation in f32).
    h = jnp.dot(x, w1_ref[...], preferred_element_type=jnp.float32) + b1_ref[...]
    h = jnp.maximum(h, 0.0)

    # Output projection -> logits.  Padded hidden cols of h are exactly 0.
    logits = jnp.dot(h.astype(compute_dtype), w2_ref[...],
                     preferred_element_type=jnp.float32) + b2_ref[...]

    if write_logits:
        out_refs[0][...] = logits.astype(out_refs[0].dtype)

    if compute_loss:
        loss_ref = out_refs[-1]
        # Per-example cross-entropy, f32 epilogue.  Padded logit columns carry a
        # -1e30 bias so they contribute nothing to the max / logsumexp.
        m = jnp.max(logits, axis=-1, keepdims=True)
        lse = m + jnp.log(jnp.sum(jnp.exp(logits - m), axis=-1, keepdims=True))

        lbl = labels_ref[...]                                          # (tb, 1)
        cols = jax.lax.broadcasted_iota(jnp.int32, logits.shape, 1)    # (tb, Lp)
        picked = jnp.sum(jnp.where(cols == lbl, logits, 0.0), axis=-1, keepdims=True)
        per_ex = lse - picked                                          # (tb, 1)

        # Mask padded rows; emit one lane-dense partial sum per tile.
        valid = lbl >= 0
        tile_sum = jnp.sum(jnp.where(valid, per_ex, 0.0), axis=0, keepdims=True)  # (1,1)
        loss_ref[...] = jnp.broadcast_to(tile_sum[:, :, None], loss_ref.shape)


def prepare_params(params, *, compute_dtype=jnp.bfloat16):
    """Transpose / pad / cast both Linear layers ONCE (hoisted out of the step).

    PyTorch Linear: y = x @ W.T + b.  The contraction axis (2H) is left at its
    true size K so x never needs padding; only the hidden/label output axes are
    padded to full 128-lane vregs (zero hidden columns, -1e30 label bias)."""
    w1, b1, w2, b2 = params["w1"], params["b1"], params["w2"], params["b2"]
    K = w1.shape[1]                      # in_features = 2 * hidden_size
    assert w1.shape[0] == K
    L, K2 = w2.shape
    assert K2 == K
    Kh = _round_up(K, _LANE)             # padded hidden width (zero columns)
    Lp = _round_up(L, _LANE)             # padded label width (-inf bias columns)
    w1_p = jnp.pad(jnp.asarray(w1).T, ((0, 0), (0, Kh - K))).astype(compute_dtype)
    b1_p = jnp.pad(jnp.asarray(b1).reshape(1, -1).astype(jnp.float32),
                   ((0, 0), (0, Kh - K)))
    w2_p = jnp.pad(jnp.asarray(w2).T, ((0, Kh - K), (0, Lp - L))).astype(compute_dtype)
    b2_p = jnp.pad(jnp.asarray(b2).reshape(1, -1).astype(jnp.float32),
                   ((0, 0), (0, Lp - L)), constant_values=_NEG_INF)
    return {"w1": w1_p, "b1": b1_p, "w2": w2_p, "b2": b2_p,
            "in_features": K, "num_labels": L,
            "compute_dtype": jnp.dtype(compute_dtype)}


def meta_path_predictor_forward(user_embeds, labels=None, *, params,
                                tile_rows=None, compute_dtype=jnp.bfloat16,
                                return_logits=True, logits_dtype=jnp.float32):
    """user_embeds: (B, 2, H) f32, labels: (B,) int or None.

    `params` may be raw {"w1","b1","w2","b2"} or the output of prepare_params().
    Returns {'loss': scalar f32 (or None), 'logits': (B, num_labels) (or None)}.
    """
    prepared = params if "in_features" in params else prepare_params(
        params, compute_dtype=compute_dtype)
    cdt = prepared["compute_dtype"]
    K = prepared["in_features"]
    L = prepared["num_labels"]
    w1_p, b1_p, w2_p, b2_p = (prepared["w1"], prepared["b1"],
                              prepared["w2"], prepared["b2"])
    Kh = w1_p.shape[1]
    Lp = w2_p.shape[1]

    B, two, H = user_embeds.shape
    assert two == 2 and 2 * H == K
    compute_loss = labels is not None
    assert return_logits or compute_loss, "nothing to compute"

    # Free reshape; x is streamed to the kernel unpadded and uncast.
    x = user_embeds.reshape(B, K)

    num_cores, budget = _device_budget()
    cdt_size = jnp.dtype(cdt).itemsize
    x_size = jnp.dtype(x.dtype).itemsize
    logits_size = jnp.dtype(logits_dtype).itemsize
    tb = _choose_tile_rows(B, K, Kh, Lp, cdt_size, x_size, logits_size,
                           return_logits, compute_loss, num_cores, budget,
                           tile_rows)
    nb = pl.cdiv(B, tb)
    B_out = nb * tb

    # Tiny f32 row pad only when B is not a tile multiple (no dtype cast).
    if B_out != B:
        x = jnp.pad(x, ((0, B_out - B), (0, 0)))

    resident = dict(pipeline_mode=pl.Buffered(1))   # constant blocks: single-buffer
    in_specs = [
        pl.BlockSpec((tb, K), lambda i: (i, 0)),               # x (streamed rows)
        pl.BlockSpec((K, Kh), lambda i: (0, 0), **resident),   # w1 (resident)
        pl.BlockSpec((1, Kh), lambda i: (0, 0), **resident),   # b1 (resident)
        pl.BlockSpec((Kh, Lp), lambda i: (0, 0), **resident),  # w2 (resident)
        pl.BlockSpec((1, Lp), lambda i: (0, 0), **resident),   # b2 (resident)
    ]
    inputs = [x, w1_p, b1_p, w2_p, b2_p]
    if compute_loss:
        labels_p = jnp.pad(labels.reshape(-1).astype(jnp.int32), (0, B_out - B),
                           constant_values=-1).reshape(B_out, 1)
        in_specs.append(pl.BlockSpec((tb, 1), lambda i: (i, 0)))
        inputs.append(labels_p)

    out_shape, out_specs = [], []
    if return_logits:
        out_shape.append(jax.ShapeDtypeStruct((B_out, Lp), logits_dtype))
        out_specs.append(pl.BlockSpec((tb, Lp), lambda i: (i, 0)))
    if compute_loss:
        out_shape.append(jax.ShapeDtypeStruct((nb, 1, _LANE), jnp.float32))
        out_specs.append(pl.BlockSpec((1, 1, _LANE), lambda i: (i, 0, 0)))

    est = _estimate_vmem_bytes(tb, K, Kh, Lp, cdt_size, x_size, logits_size,
                               return_logits, compute_loss)
    vmem_limit = int(min(budget, max(32 * 1024 * 1024, est * 5 // 4 + (4 << 20))))

    cost = pl.CostEstimate(
        flops=2 * B_out * Kh * (K + Lp),
        transcendentals=(B_out * (Lp + 1)) if compute_loss else 0,
        bytes_accessed=(B_out * K * x_size
                        + K * Kh * cdt_size + Kh * Lp * cdt_size + (Kh + Lp) * 4
                        + ((B_out * 4 + nb * _LANE * 4) if compute_loss else 0)
                        + ((B_out * Lp * logits_size) if return_logits else 0)),
    )

    outs = pl.pallas_call(
        functools.partial(_mlp_ce_kernel, compute_dtype=cdt,
                          write_logits=return_logits, compute_loss=compute_loss),
        out_shape=tuple(out_shape),
        grid_spec=pltpu.PrefetchScalarGridSpec(
            num_scalar_prefetch=0,
            grid=(nb,),
            in_specs=in_specs,
            out_specs=tuple(out_specs),
        ),
        compiler_params=pltpu.CompilerParams(
            dimension_semantics=("parallel",),
            vmem_limit_bytes=vmem_limit,
        ),
        cost_estimate=cost,
    )(*inputs)

    idx = 0
    logits = None
    if return_logits:
        logits = outs[idx][:B, :L]
        idx += 1
    loss = None
    if compute_loss:
        loss = jnp.sum(outs[idx][:, 0, 0]) / B
    return {"loss": loss, "logits": logits}


def init_params(key, hidden_size, num_labels):
    """Deterministic PyTorch-style (kaiming-uniform-ish) init of the two Linears."""
    in1 = hidden_size * 2
    k1, k2, k3, k4 = jax.random.split(key, 4)
    bound1 = 1.0 / (in1 ** 0.5)
    w1 = jax.random.uniform(k1, (in1, in1), jnp.float32, -bound1, bound1)
    b1 = jax.random.uniform(k2, (in1,), jnp.float32, -bound1, bound1)
    bound2 = 1.0 / (in1 ** 0.5)
    w2 = jax.random.uniform(k3, (num_labels, in1), jnp.float32, -bound2, bound2)
    b2 = jax.random.uniform(k4, (num_labels,), jnp.float32, -bound2, bound2)
    return {"w1": w1, "b1": b1, "w2": w2, "b2": b2}


if __name__ == "__main__":
    hidden_size = 32
    num_labels = 4
    batch = 8

    key = jax.random.PRNGKey(0)
    kp, kx, kl = jax.random.split(key, 3)

    params = init_params(kp, hidden_size, num_labels)
    user_embeds = jax.random.normal(kx, (batch, 2, hidden_size), jnp.float32)
    labels = jax.random.randint(kl, (batch,), 0, num_labels, jnp.int32)

    # Weights are transposed / padded / cast ONCE, outside the per-step jit.
    prepared = prepare_params(params, compute_dtype=jnp.bfloat16)

    # Full path (logits + loss).
    fwd = jax.jit(functools.partial(meta_path_predictor_forward, params=prepared))
    out = fwd(user_embeds, labels)
    jax.block_until_ready(out["logits"])
    jax.block_until_ready(out["loss"])

    # Loss-only (training) path — skips the logits HBM writeback.
    fwd_loss_only = jax.jit(functools.partial(
        meta_path_predictor_forward, params=prepared, return_logits=False))
    out_loss = fwd_loss_only(user_embeds, labels)
    jax.block_until_ready(out_loss["loss"])

    # Logits-only (inference, labels=None) path — skips the whole CE epilogue.
    fwd_infer = jax.jit(functools.partial(meta_path_predictor_forward, params=prepared))
    out_inf = fwd_infer(user_embeds)
    jax.block_until_ready(out_inf["logits"])

    # Pure-JAX reference with the same bf16 operand quantization / f32 accumulate.
    x = user_embeds.reshape(batch, 2 * hidden_size)
    xq = x.astype(jnp.bfloat16)
    w1q = params["w1"].T.astype(jnp.bfloat16)
    w2q = params["w2"].T.astype(jnp.bfloat16)
    h_ref = jnp.maximum(
        jnp.dot(xq, w1q, preferred_element_type=jnp.float32) + params["b1"], 0.0)
    logits_ref = jnp.dot(h_ref.astype(jnp.bfloat16), w2q,
                         preferred_element_type=jnp.float32) + params["b2"]
    lse = jax.scipy.special.logsumexp(logits_ref, axis=-1)
    loss_ref = jnp.mean(lse - logits_ref[jnp.arange(batch), labels])

    assert out["logits"].shape == (batch, num_labels)
    assert jnp.allclose(out["logits"], logits_ref, atol=1e-3, rtol=1e-3)
    assert jnp.allclose(out["loss"], loss_ref, atol=1e-3, rtol=1e-3)
    assert jnp.allclose(out_loss["loss"], out["loss"], atol=1e-6, rtol=1e-6)
    assert out_inf["loss"] is None
    assert jnp.allclose(out_inf["logits"], out["logits"], atol=1e-6, rtol=1e-6)

    print("KERNEL_OK")
</pallas_src>

<mosaic_0001>
module attributes {stable_mosaic.version = 11 : i64} {
  func.func @_mlp_ce_kernel(%arg0: i32, %arg1: memref<8x64xf32, #tpu.memory_space<vmem>>, %arg2: memref<64x128xbf16, #tpu.memory_space<vmem>>, %arg3: memref<1x128xf32, #tpu.memory_space<vmem>>, %arg4: memref<128x128xbf16, #tpu.memory_space<vmem>>, %arg5: memref<1x128xf32, #tpu.memory_space<vmem>>, %arg6: memref<8x1xi32, #tpu.memory_space<vmem>>, %arg7: memref<8x128xf32, #tpu.memory_space<vmem>>, %arg8: memref<1x1x128xf32, #tpu.memory_space<vmem>>) attributes {dimension_semantics = [#tpu.dimension_semantics<parallel>], iteration_bounds = array<i64: 1>, scalar_prefetch = 0 : i64, scratch_operands = 0 : i64, tpu.core_type = #tpu.core_type<tc>, window_params = [{transform_indices = @transform_0, window_bounds = array<i64: 8, 64>}, {pipeline_mode = #tpu.pipeline_mode<synchronous>, transform_indices = @transform_1, window_bounds = array<i64: 64, 128>}, {pipeline_mode = #tpu.pipeline_mode<synchronous>, transform_indices = @transform_2, window_bounds = array<i64: 1, 128>}, {pipeline_mode = #tpu.pipeline_mode<synchronous>, transform_indices = @transform_3, window_bounds = array<i64: 128, 128>}, {pipeline_mode = #tpu.pipeline_mode<synchronous>, transform_indices = @transform_4, window_bounds = array<i64: 1, 128>}, {transform_indices = @transform_5, window_bounds = array<i64: 8, 1>}, {transform_indices = @transform_6, window_bounds = array<i64: 8, 128>}, {transform_indices = @transform_7, window_bounds = array<i64: 1, 1, 128>}]} {
    %c0 = arith.constant 0 : index
    %c0_0 = arith.constant 0 : index
    %0 = vector.load %arg1[%c0, %c0_0] : memref<8x64xf32, #tpu.memory_space<vmem>>, vector<8x64xf32>
    %1 = arith.truncf %0 : vector<8x64xf32> to vector<8x64xbf16>
    %c0_1 = arith.constant 0 : index
    %c0_2 = arith.constant 0 : index
    %2 = vector.load %arg2[%c0_1, %c0_2] : memref<64x128xbf16, #tpu.memory_space<vmem>>, vector<64x128xbf16>
    %cst = arith.constant dense<0.000000e+00> : vector<8x128xf32>
    %3 = tpu.matmul %1, %2, %cst {dimension_numbers = #tpu.dot_dimension_numbers<[1], [0], [0], [1], [0, 0, 1, 1], [], []>} : vector<8x64xbf16>, vector<64x128xbf16>, vector<8x128xf32> -> vector<8x128xf32>
    %c0_3 = arith.constant 0 : index
    %c0_4 = arith.constant 0 : index
    %4 = vector.load %arg3[%c0_3, %c0_4] : memref<1x128xf32, #tpu.memory_space<vmem>>, vector<1x128xf32>
    %5 = vector.broadcast %4 : vector<1x128xf32> to vector<8x128xf32>
    %6 = arith.addf %3, %5 : vector<8x128xf32>
    %cst_5 = arith.constant 0.000000e+00 : f32
    %7 = vector.broadcast %cst_5 : f32 to vector<8x128xf32>
    %8 = arith.maximumf %6, %7 : vector<8x128xf32>
    %9 = arith.truncf %8 : vector<8x128xf32> to vector<8x128xbf16>
    %c0_6 = arith.constant 0 : index
    %c0_7 = arith.constant 0 : index
    %10 = vector.load %arg4[%c0_6, %c0_7] : memref<128x128xbf16, #tpu.memory_space<vmem>>, vector<128x128xbf16>
    %cst_8 = arith.constant dense<0.000000e+00> : vector<8x128xf32>
    %11 = tpu.matmul %9, %10, %cst_8 {dimension_numbers = #tpu.dot_dimension_numbers<[1], [0], [0], [1], [0, 0, 1, 1], [], []>} : vector<8x128xbf16>, vector<128x128xbf16>, vector<8x128xf32> -> vector<8x128xf32>
    %c0_9 = arith.constant 0 : index
    %c0_10 = arith.constant 0 : index
    %12 = vector.load %arg5[%c0_9, %c0_10] : memref<1x128xf32, #tpu.memory_space<vmem>>, vector<1x128xf32>
    %13 = vector.broadcast %12 : vector<1x128xf32> to vector<8x128xf32>
    %14 = arith.addf %11, %13 : vector<8x128xf32>
    %c0_11 = arith.constant 0 : index
    %c0_12 = arith.constant 0 : index
    %15 = vector.load %arg7[%c0_11, %c0_12] : memref<8x128xf32, #tpu.memory_space<vmem>>, vector<8x128xf32>
    tpu.vector_store %arg7[%c0_11, %c0_12], %14 {strides = array<i32>} : memref<8x128xf32, #tpu.memory_space<vmem>>, vector<8x128xf32>,
    %cst_13 = arith.constant dense<0xFF800000> : vector<8xf32>
    %16 = vector.multi_reduction <maximumf>, %14, %cst_13 [1] : vector<8x128xf32> to vector<8xf32>
    %17 = vector.shape_cast %16 : vector<8xf32> to vector<8x1xf32>
    %18 = vector.broadcast %17 : vector<8x1xf32> to vector<8x128xf32>
    %19 = arith.subf %14, %18 : vector<8x128xf32>
    %20 = math.exp %19 : vector<8x128xf32>
    %cst_14 = arith.constant dense<0.000000e+00> : vector<8xf32>
    %21 = vector.multi_reduction <add>, %20, %cst_14 [1] : vector<8x128xf32> to vector<8xf32>
    %22 = vector.shape_cast %21 : vector<8xf32> to vector<8x1xf32>
    %23 = math.log %22 : vector<8x1xf32>
    %24 = arith.addf %17, %23 : vector<8x1xf32>
    %c0_15 = arith.constant 0 : index
    %c0_16 = arith.constant 0 : index
    %25 = vector.load %arg6[%c0_15, %c0_16] : memref<8x1xi32, #tpu.memory_space<vmem>>, vector<8x1xi32>
    %26 = tpu.iota {dimensions = array<i32: 1>} : vector<8x128xi32>
    %27 = vector.broadcast %25 : vector<8x1xi32> to vector<8x128xi32>
    %28 = arith.cmpi eq, %26, %27 : vector<8x128xi32>
    %cst_17 = arith.constant 0.000000e+00 : f32
    %29 = vector.broadcast %cst_17 : f32 to vector<8x128xf32>
    %30 = arith.select %28, %14, %29 : vector<8x128xi1>, vector<8x128xf32>
    %cst_18 = arith.constant dense<0.000000e+00> : vector<8xf32>
    %31 = vector.multi_reduction <add>, %30, %cst_18 [1] : vector<8x128xf32> to vector<8xf32>
    %32 = vector.shape_cast %31 : vector<8xf32> to vector<8x1xf32>
    %33 = arith.subf %24, %32 : vector<8x1xf32>
    %c0_i32 = arith.constant 0 : i32
    %34 = vector.broadcast %c0_i32 : i32 to vector<8x1xi32>
    %35 = arith.cmpi sge, %25, %34 : vector<8x1xi32>
    %cst_19 = arith.constant 0.000000e+00 : f32
    %36 = vector.broadcast %cst_19 : f32 to vector<8x1xf32>
    %37 = arith.select %35, %33, %36 : vector<8x1xi1>, vector<8x1xf32>
    %cst_20 = arith.constant dense<0.000000e+00> : vector<1xf32>
    %38 = vector.multi_reduction <add>, %37, %cst_20 [0] : vector<8x1xf32> to vector<1xf32>
    %39 = vector.shape_cast %38 : vector<1xf32> to vector<1x1xf32>
    %40 = vector.shape_cast %39 : vector<1x1xf32> to vector<1x1x1xf32>
    %41 = vector.shape_cast %40 : vector<1x1x1xf32> to vector<1x1x1xf32>
    %42 = vector.broadcast %41 : vector<1x1x1xf32> to vector<1x1x128xf32>
    %c0_21 = arith.constant 0 : index
    %c0_22 = arith.constant 0 : index
    %c0_23 = arith.constant 0 : index
    %43 = vector.load %arg8[%c0_21, %c0_22, %c0_23] : memref<1x1x128xf32, #tpu.memory_space<vmem>>, vector<1x1x128xf32>
    tpu.vector_store %arg8[%c0_21, %c0_22, %c0_23], %42 {strides = array<i32>} : memref<1x1x128xf32, #tpu.memory_space<vmem>>, vector<1x1x128xf32>,
    return
  }
  func.func @transform_0(%arg0: i32) -> (i32, i32) {
    %c0_i32 = arith.constant 0 : i32
    %c0_i32_0 = arith.constant 0 : i32
    return %arg0, %c0_i32 : i32, i32
  }
  func.func @transform_1(%arg0: i32) -> (i32, i32) {
    %c0_i32 = arith.constant 0 : i32
    %c0_i32_0 = arith.constant 0 : i32
    %c0_i32_1 = arith.constant 0 : i32
    return %c0_i32, %c0_i32_0 : i32, i32
  }
  func.func @transform_2(%arg0: i32) -> (i32, i32) {
    %c0_i32 = arith.constant 0 : i32
    %c0_i32_0 = arith.constant 0 : i32
    %c0_i32_1 = arith.constant 0 : i32
    return %c0_i32, %c0_i32_0 : i32, i32
  }
  func.func @transform_3(%arg0: i32) -> (i32, i32) {
    %c0_i32 = arith.constant 0 : i32
    %c0_i32_0 = arith.constant 0 : i32
    %c0_i32_1 = arith.constant 0 : i32
    return %c0_i32, %c0_i32_0 : i32, i32
  }
  func.func @transform_4(%arg0: i32) -> (i32, i32) {
    %c0_i32 = arith.constant 0 : i32
    %c0_i32_0 = arith.constant 0 : i32
    %c0_i32_1 = arith.constant 0 : i32
    return %c0_i32, %c0_i32_0 : i32, i32
  }
  func.func @transform_5(%arg0: i32) -> (i32, i32) {
    %c0_i32 = arith.constant 0 : i32
    %c0_i32_0 = arith.constant 0 : i32
    return %arg0, %c0_i32 : i32, i32
  }
  func.func @transform_6(%arg0: i32) -> (i32, i32) {
    %c0_i32 = arith.constant 0 : i32
    %c0_i32_0 = arith.constant 0 : i32
    return %arg0, %c0_i32 : i32, i32
  }
  func.func @transform_7(%arg0: i32) -> (i32, i32, i32) {
    %c0_i32 = arith.constant 0 : i32
    %c0_i32_0 = arith.constant 0 : i32
    %c0_i32_1 = arith.constant 0 : i32
    return %arg0, %c0_i32, %c0_i32_0 : i32, i32, i32
  }
}

</mosaic_0001>

<llo_original>
// kernel: meta_path_predictor_forward.1
$region0: #{meta_path_predictor_forward.1}
  #allocation0 [shape = 'u32[]', space=smem, size = 0x4, offset = 0x4, fixed_abs, tag = 'smem constant byte address 0x4 - core index']
  #allocation1 [shape = 'u32[144,128]{1,0:T(1,128)}', space=vmem, size = 0x12000, scoped, tag = 'internal scratch']
  %s0 = inlined_call_operand.vmem [shape: f32[8,64], index: 0, kind: input, shape index: {}]
  %s1 = inlined_call_operand.hbm [shape: bf16[64,128], index: 1, kind: input, shape index: {}]
  %s2 = inlined_call_operand.vmem [shape: f32[1,128], index: 2, kind: input, shape index: {}]
  %s3 = inlined_call_operand.vmem [shape: bf16[128,128], index: 3, kind: input, shape index: {}]
  %s4 = inlined_call_operand.vmem [shape: f32[1,128], index: 4, kind: input, shape index: {}]
  %s5 = inlined_call_operand.vmem [shape: s32[8,1], index: 5, kind: input, shape index: {}]
  %s6 = inlined_call_operand.vmem [shape: f32[8,128], index: 6, kind: output, shape index: {0}]
  %s7 = inlined_call_operand.vmem [shape: f32[1,1,128], index: 7, kind: output, shape index: {1}]
  %8 = xla_tuple %s6, %s7
  %s9 = sld [smem:[#allocation0]]
  $region46: #{meta_path_predictor_forward.1} parent=0
    _
  %s11 = ssub.s32 1, %s9
  %s12 = scalar_select 0, %s11, %s9
  $region1: #{meta_path_predictor_forward.1} parent=0
    #allocation2 [shape = 'u8[16384]{0}', space=vmem, size = 0x4000, scoped, tag = 'input window, operand 1, single buffered']
    #allocation3 [shape = 's32[1]{0}', space=sflag, size = 0x4, scoped, tag = 'scoped memory for meta_path_predictor_forward.1']
    %13 = vsyncpa [#allocation3], 0
    // Predicated region
    $region2: #{meta_path_predictor_forward.1} parent=1 // pred_check
      _
    $region3: #{meta_path_predictor_forward.1} parent=1 // pred_check_branch
      %15 = sbr.rel (0) target = $region5
    $region4: #{meta_path_predictor_forward.1} parent=1 // pred_region
      _
    $region5: #{meta_path_predictor_forward.1} parent=1 // pred_fallthru
      _
    // Predicated region
    $region6: #{meta_path_predictor_forward.1} parent=1 // pred_check
      _
    $region7: #{meta_path_predictor_forward.1} parent=1 // pred_check_branch
      %17 = sbr.rel (0) target = $region9
    $region8: #{meta_path_predictor_forward.1} parent=1 // pred_region
      %s19 = ssub.s32 512, 512
      %20 = vsyncadd [#allocation3], %s19
      %s21 = sshll.u32 [#allocation2], 4
      %s22 = int_to_ptr.vmem [resolvable:$true] %s21
      %27 = dma.hbm_to_vmem [thread:$0]  %s1, 512, %s22, [#allocation3], 64, 64, 4
    $region9: #{meta_path_predictor_forward.1} parent=1 // pred_fallthru
      _
    // Predicated region
    $region10: #{meta_path_predictor_forward.1} parent=1 // pred_check
      _
    $region11: #{meta_path_predictor_forward.1} parent=1 // pred_check_branch
      %29 = sbr.rel (0) target = $region13
    $region12: #{meta_path_predictor_forward.1} parent=1 // pred_region
      _
    $region13: #{meta_path_predictor_forward.1} parent=1 // pred_fallthru
      _
    // Predicated region
    $region14: #{meta_path_predictor_forward.1} parent=1 // pred_check
      _
    $region15: #{meta_path_predictor_forward.1} parent=1 // pred_check_branch
      %31 = sbr.rel (0) target = $region17
    $region16: #{meta_path_predictor_forward.1} parent=1 // pred_region
      _
    $region17: #{meta_path_predictor_forward.1} parent=1 // pred_fallthru
      _
    // Predicated region
    $region18: #{meta_path_predictor_forward.1} parent=1 // pred_check
      _
    $region19: #{meta_path_predictor_forward.1} parent=1 // pred_check_branch
      %33 = sbr.rel (0) target = $region21
    $region20: #{meta_path_predictor_forward.1} parent=1 // pred_region
      _
    $region21: #{meta_path_predictor_forward.1} parent=1 // pred_fallthru
      _
    // Predicated region
    $region22: #{meta_path_predictor_forward.1} parent=1 // pred_check
      _
    $region23: #{meta_path_predictor_forward.1} parent=1 // pred_check_branch
      %35 = sbr.rel (0) target = $region25
    $region24: #{meta_path_predictor_forward.1} parent=1 // pred_region
      _
    $region25: #{meta_path_predictor_forward.1} parent=1 // pred_fallthru
      _
    // Predicated region
    $region26: #{meta_path_predictor_forward.1} parent=1 // pred_check
      _
    $region27: #{meta_path_predictor_forward.1} parent=1 // pred_check_branch
      %37 = sbr.rel (0) target = $region29
    $region28: #{meta_path_predictor_forward.1} parent=1 // pred_region
      %38 = dma.done [#allocation3], 512
    $region29: #{meta_path_predictor_forward.1} parent=1 // pred_fallthru
      _
    %v40 = vld [vmem:[%s0] sm:$0xff]
    %v41 = vpack.c.bf16 %v40, %v40
    %v42 = vld [vmem:[#allocation2] sm:$0xf]
    %v43 = vld [vmem:[#allocation2 + $0x4] sm:$0xf]
    %v44 = vld [vmem:[#allocation2 + $0x8] sm:$0xf]
    %v45 = vld [vmem:[#allocation2 + $0xc] sm:$0xf]
    %v46 = vld [vmem:[#allocation2 + $0x10] sm:$0xf]
    %v47 = vld [vmem:[#allocation2 + $0x14] sm:$0xf]
    %v48 = vld [vmem:[#allocation2 + $0x18] sm:$0xf]
    %v49 = vld [vmem:[#allocation2 + $0x1c] sm:$0xf]
    %v50 = vld [vmem:[%s2] sm:$0x1]
    %v52 = vlaneseq
    %v53 = vshrl.u32 %v52, 7
    %v54 = vsub.s32 0, %v53
    %v55 = vrot.slane %v50, %v54
    %v65 = vunpack.c.l.b16 %v42
    %v66 = vunpack.c.l.b16 %v43
    %v67 = vunpack.c.l.b16 %v44
    %v68 = vunpack.c.l.b16 %v45
    %v69 = vunpack.c.l.b16 %v46
    %v70 = vunpack.c.l.b16 %v47
    %v71 = vunpack.c.l.b16 %v48
    %v72 = vunpack.c.l.b16 %v49
    %v73 = vpack.c.b16 %v66, %v65
    %v74 = vpack.c.b16 %v68, %v67
    %v75 = vpack.c.b16 %v70, %v69
    %v76 = vpack.c.b16 %v72, %v71
    %vm81 = vcmask 523264
    %v83 = vsel %vm81, %v41, 0
    %85 = vmatprep.subr.bf16.mxu0 0
    %86 = vmatpush1.bf16.msra.mxu0 %v73
    %87 = vmatprep.subr.bf16.mxu0 0
    %88 = vmatpush1.bf16.msra.mxu0 %v74
    %89 = vmatprep.subr.bf16.mxu0 0
    %90 = vmatpush1.bf16.msra.mxu0 %v75
    %91 = vmatprep.subr.bf16.mxu0 0
    %92 = vmatpush1.bf16.msra.mxu0 %v76
    %93 = vmatprep.subr.bf16.mxu0 0
    %94 = vmatpush1.bf16.msra.mxu0 0
    %95 = vmatprep.subr.bf16.mxu0 0
    %96 = vmatpush1.bf16.msra.mxu0 0
    %97 = vmatprep.subr.bf16.mxu0 0
    %98 = vmatpush1.bf16.msra.mxu0 0
    %99 = vmatprep.subr.bf16.mxu0 0
    %100 = vmatpush1.bf16.msra.mxu0 0
    %101 = vmatprep.subr.bf16.mxu0 0
    %102 = vmatpush1.bf16.msra.mxu0 0
    %103 = vmatprep.subr.bf16.mxu0 0
    %104 = vmatpush1.bf16.msra.mxu0 0
    %105 = vmatprep.subr.bf16.mxu0 0
    %106 = vmatpush1.bf16.msra.mxu0 0
    %107 = vmatprep.subr.bf16.mxu0 0
    %108 = vmatpush1.bf16.msra.mxu0 0
    %109 = vmatprep.subr.bf16.mxu0 0
    %110 = vmatpush1.bf16.msra.mxu0 0
    %111 = vmatprep.subr.bf16.mxu0 0
    %112 = vmatpush1.bf16.msra.mxu0 0
    %113 = vmatprep.subr.bf16.mxu0 0
    %114 = vmatpush1.bf16.msra.mxu0 0
    %115 = vmatprep.subr.bf16.mxu0 0
    %116 = vmatpush1.bf16.msra.mxu0 0
    %117 = vmatprep.mubr.bf16.mxu0 0
    %118 = vmatmul.mubr.bf16.gmra.mrb[0].mxu0 %v83
    %v119 = vpop.f32.mrb[0].mxu0
    %v120 = vadd.f32 %v55, %v119
    %v121 = vpop.f32.mrb[0].mxu0
    %v122 = vpop.f32.mrb[0].mxu0
    %v123 = vpop.f32.mrb[0].mxu0
    %124 = vdwg.mxu0
    %v125 = vmax.f32 %v120, 0.0
    %v126 = vpack.c.bf16 %v125, %v125
    %v127 = vld [vmem:[%s3] sm:$0xf]
    %v128 = vld [vmem:[%s3 + $0x4] sm:$0xf]
    %v129 = vld [vmem:[%s3 + $0x8] sm:$0xf]
    %v130 = vld [vmem:[%s3 + $0xc] sm:$0xf]
    %v131 = vld [vmem:[%s3 + $0x10] sm:$0xf]
    %v132 = vld [vmem:[%s3 + $0x14] sm:$0xf]
    %v133 = vld [vmem:[%s3 + $0x18] sm:$0xf]
    %v134 = vld [vmem:[%s3 + $0x1c] sm:$0xf]
    %v135 = vld [vmem:[%s3 + $0x20] sm:$0xf]
    %v136 = vld [vmem:[%s3 + $0x24] sm:$0xf]
    %v137 = vld [vmem:[%s3 + $0x28] sm:$0xf]
    %v138 = vld [vmem:[%s3 + $0x2c] sm:$0xf]
    %v139 = vld [vmem:[%s3 + $0x30] sm:$0xf]
    %v140 = vld [vmem:[%s3 + $0x34] sm:$0xf]
    %v141 = vld [vmem:[%s3 + $0x38] sm:$0xf]
    %v142 = vld [vmem:[%s3 + $0x3c] sm:$0xf]
    %v143 = vld [vmem:[%s4] sm:$0x1]
    %v145 = vlaneseq
    %v146 = vshrl.u32 %v145, 7
    %v147 = vsub.s32 0, %v146
    %v148 = vrot.slane %v143, %v147
    %v166 = vunpack.c.l.b16 %v127
    %v167 = vunpack.c.l.b16 %v128
    %v168 = vunpack.c.l.b16 %v129
    %v169 = vunpack.c.l.b16 %v130
    %v170 = vunpack.c.l.b16 %v131
    %v171 = vunpack.c.l.b16 %v132
    %v172 = vunpack.c.l.b16 %v133
    %v173 = vunpack.c.l.b16 %v134
    %v174 = vunpack.c.l.b16 %v135
    %v175 = vunpack.c.l.b16 %v136
    %v176 = vunpack.c.l.b16 %v137
    %v177 = vunpack.c.l.b16 %v138
    %v178 = vunpack.c.l.b16 %v139
    %v179 = vunpack.c.l.b16 %v140
    %v180 = vunpack.c.l.b16 %v141
    %v181 = vunpack.c.l.b16 %v142
    %v182 = vpack.c.b16 %v167, %v166
    %v183 = vpack.c.b16 %v169, %v168
    %v184 = vpack.c.b16 %v171, %v170
    %v185 = vpack.c.b16 %v173, %v172
    %v186 = vpack.c.b16 %v175, %v174
    %v187 = vpack.c.b16 %v177, %v176
    %v188 = vpack.c.b16 %v179, %v178
    %v189 = vpack.c.b16 %v181, %v180
    %198 = vmatprep.subr.bf16.mxu0 0
    %199 = vmatpush1.bf16.msra.mxu0 %v182
    %200 = vmatprep.subr.bf16.mxu0 0
    %201 = vmatpush1.bf16.msra.mxu0 %v183
    %202 = vmatprep.subr.bf16.mxu0 0
    %203 = vmatpush1.bf16.msra.mxu0 %v184
    %204 = vmatprep.subr.bf16.mxu0 0
    %205 = vmatpush1.bf16.msra.mxu0 %v185
    %206 = vmatprep.subr.bf16.mxu0 0
    %207 = vmatpush1.bf16.msra.mxu0 %v186
    %208 = vmatprep.subr.bf16.mxu0 0
    %209 = vmatpush1.bf16.msra.mxu0 %v187
    %210 = vmatprep.subr.bf16.mxu0 0
    %211 = vmatpush1.bf16.msra.mxu0 %v188
    %212 = vmatprep.subr.bf16.mxu0 0
    %213 = vmatpush1.bf16.msra.mxu0 %v189
    %214 = vmatprep.subr.bf16.mxu0 0
    %215 = vmatpush1.bf16.msra.mxu0 0
    %216 = vmatprep.subr.bf16.mxu0 0
    %217 = vmatpush1.bf16.msra.mxu0 0
    %218 = vmatprep.subr.bf16.mxu0 0
    %219 = vmatpush1.bf16.msra.mxu0 0
    %220 = vmatprep.subr.bf16.mxu0 0
    %221 = vmatpush1.bf16.msra.mxu0 0
    %222 = vmatprep.subr.bf16.mxu0 0
    %223 = vmatpush1.bf16.msra.mxu0 0
    %224 = vmatprep.subr.bf16.mxu0 0
    %225 = vmatpush1.bf16.msra.mxu0 0
    %226 = vmatprep.subr.bf16.mxu0 0
    %227 = vmatpush1.bf16.msra.mxu0 0
    %228 = vmatprep.subr.bf16.mxu0 0
    %229 = vmatpush1.bf16.msra.mxu0 0
    %230 = vmatprep.mubr.bf16.mxu0 0
    %231 = vmatmul.mubr.bf16.gmra.mrb[0].mxu0 %v126
    %v232 = vpop.f32.mrb[0].mxu0
    %v233 = vadd.f32 %v148, %v232
    %v234 = vpop.f32.mrb[0].mxu0
    %v235 = vpop.f32.mrb[0].mxu0
    %v236 = vpop.f32.mrb[0].mxu0
    %237 = vdwg.mxu0
    %238 = vst [vmem:[%s6] sm:$0xff] %v233
    %239 = vmax.xlane.f32.xlu0 %v233
    %v240 = vpop.xlane.xlu0 %239
    %v241 = vsub.f32 %v233, %v240
    %v242 = vmul.f32 %v241, 1.442695
    %v243 = vpow.pop %v242
    %244 = vadd.xlane.f32.xlu0 %v243
    %v245 = vpop.xlane.xlu0 %244
    %v246 = vlog2.pop %v245
    %v247 = vmul.f32 %v246, 0.6931472
    %v248 = vadd.f32 %v240, %v247
    %v249 = vld [vmem:[%s5] sm:$0xff]
    %v250 = vlaneseq
    %v251 = vand.u32 %v250, 127
    %252 = vset.pattern.permute.xlu0 0
    %253 = vperm.xlu0 %252, %v249
    %v254 = vpop.permute.xlu0 %253
    %vm255 = vcmp.eq.s32.totalorder %v251, %v254
    %v256 = vsel %vm255, %v233, 0.0
    %257 = vadd.xlane.f32.xlu0 %v256
    %v258 = vpop.xlane.xlu0 %257
    %v259 = vsub.f32 %v248, %v258
    %vm260 = vcmp.ge.s32.totalorder %v249, 0
    %v261 = vsel %vm260, %v259, 0.0
    %vm262 = vcmask 7168
    %v263 = vsel %vm262, %v261, 0.0
    %v264 = vrot.slane %v263, 4
    %v265 = vadd.f32 %v263, %v264
    %v266 = vrot.slane %v265, 2
    %v267 = vadd.f32 %v265, %v266
    %v268 = vrot.slane %v267, 1
    %v269 = vadd.f32 %v267, %v268
    %271 = vset.pattern.permute.xlu0 0
    %272 = vperm.xlu0 %271, %v269
    %v273 = vpop.permute.xlu0 %272
    %275 = vst [vmem:[%s7] sm:$0x1] %v273
    // Predicated region
    $region30: #{meta_path_predictor_forward.1} parent=1 // pred_check
      _
    $region31: #{meta_path_predictor_forward.1} parent=1 // pred_check_branch
      %277 = sbr.rel (0) target = $region33
    $region32: #{meta_path_predictor_forward.1} parent=1 // pred_region
      _
    $region33: #{meta_path_predictor_forward.1} parent=1 // pred_fallthru
      _
    // Predicated region
    $region34: #{meta_path_predictor_forward.1} parent=1 // pred_check
      _
    $region35: #{meta_path_predictor_forward.1} parent=1 // pred_check_branch
      %279 = sbr.rel (0) target = $region37
    $region36: #{meta_path_predictor_forward.1} parent=1 // pred_region
      _
    $region37: #{meta_path_predictor_forward.1} parent=1 // pred_fallthru
      _
    // Predicated region
    $region38: #{meta_path_predictor_forward.1} parent=1 // pred_check
      _
    $region39: #{meta_path_predictor_forward.1} parent=1 // pred_check_branch
      %281 = sbr.rel (0) target = $region41
    $region40: #{meta_path_predictor_forward.1} parent=1 // pred_region
      _
    $region41: #{meta_path_predictor_forward.1} parent=1 // pred_fallthru
      _
    // Predicated region
    $region42: #{meta_path_predictor_forward.1} parent=1 // pred_check
      _
    $region43: #{meta_path_predictor_forward.1} parent=1 // pred_check_branch
      %283 = sbr.rel (0) target = $region45
    $region44: #{meta_path_predictor_forward.1} parent=1 // pred_region
      _
    $region45: #{meta_path_predictor_forward.1} parent=1 // pred_fallthru
      _
    %284 = vsyncpa [#allocation3], 1

</llo_original>
